<compile_context>
chip_gen: v5e
topology: v5e:2x2
jax: 0.10.0
libtpu: 0.0.40
codegen_flags: <defaults>
</compile_context>

<pallas_src>
import jax
import jax.numpy as jnp
from jax.experimental import pallas as pl
from jax.experimental.pallas import tpu as pltpu

_LANE = 128
_SUBLANE = 8

# Resident-weight design guard: W1/W2/b1/b2 stay VMEM-resident across the
# whole grid (double-buffered by the default pipeliner), so keep them well
# under v7x's ~32 MiB scoped-VMEM default.  Beyond this, the right design is
# a K grid axis ("arbitrary") over the contraction dim with an f32
# accumulator scratch instead of resident weights.
_MAX_RESIDENT_WEIGHT_BYTES = 24 * 1024 * 1024


def _round_up(n, m):
    return ((n + m - 1) // m) * m


def _mlp_kernel(x_ref, w1_ref, b1_ref, w2_ref, b2_ref, out_ref, pred_ref):
    # x arrives unpadded f32; cast to bf16 in-kernel (cheap VPU pack) so the
    # MXU runs bf16 inputs with f32 accumulation.
    x = x_ref[...].astype(jnp.bfloat16)
    # hidden = relu(x @ W1 + b1); bias add + ReLU in f32, (1, hp) bias row
    # sublane-broadcasts in the vadd.
    h = jnp.dot(x, w1_ref[...], preferred_element_type=jnp.float32)
    h = jnp.maximum(h + b1_ref[...], 0.0)
    # logits = hidden @ W2 + b2; only the matmul input is cast to bf16.
    logits = jnp.dot(h.astype(jnp.bfloat16), w2_ref[...],
                     preferred_element_type=jnp.float32) + b2_ref[...]
    out_ref[...] = logits.astype(out_ref.dtype)

    # Fused argmax for the predict() path.  logits' last dim is the UNPADDED
    # outcome count, so there are no pad columns to mask.  First-max
    # tie-breaking matches torch.argmax / jnp.argmax.  Max/min reduces run on
    # the XLU slot, which is otherwise idle here.
    n = logits.shape[-1]
    col = jax.lax.broadcasted_iota(jnp.int32, logits.shape, 1)
    row_max = jnp.max(logits, axis=-1, keepdims=True)
    cand = jnp.where(logits == row_max, col, jnp.int32(n))
    pred_ref[...] = jnp.min(cand, axis=-1, keepdims=True)


def prepare_params(w1, b1, w2, b2):
    """One-time (model-setup) parameter prep — hoisted out of the hot path.

    Pads only the hidden dim to a lane-dense multiple of 128 and casts the
    weight matrices to bf16 (MXU-native); biases stay f32; features/outcomes
    are left unpadded.  Weights are stored already-transposed as
    (in_dim, out_dim) so the kernel computes y = x @ W + b, numerically
    matching PyTorch nn.Linear (which applies weight.T).
    """
    features, hidden = w1.shape
    outcomes = w2.shape[1]
    hp = _round_up(hidden, _LANE)
    w1_p = jnp.zeros((features, hp), jnp.bfloat16).at[:, :hidden].set(
        w1.astype(jnp.bfloat16))
    b1_p = jnp.zeros((1, hp), jnp.float32).at[:, :hidden].set(
        jnp.reshape(b1, (1, hidden)).astype(jnp.float32))
    w2_p = jnp.zeros((hp, outcomes), jnp.bfloat16).at[:hidden, :].set(
        w2.astype(jnp.bfloat16))
    b2_p = jnp.reshape(b2, (1, outcomes)).astype(jnp.float32)
    return w1_p, b1_p, w2_p, b2_p


def _choose_batch_tile(batch):
    # >=2 tiles so v7x's two TensorCores both get work along the "parallel"
    # batch axis; large tiles (cap 1024 rows) so v5e/v6e's single-TC serial
    # grid pays only a few ~0.35us per-step overheads.
    tm = _round_up(max(1, -(-batch // 2)), _SUBLANE)
    return min(tm, 1024)


def _mlp_pallas(x, w1_p, b1_p, w2_p, b2_p):
    batch, features = x.shape
    f_w, hp = w1_p.shape
    outcomes = w2_p.shape[1]
    assert f_w == features, "x feature dim must match prepared W1"

    weight_bytes = (w1_p.size * w1_p.dtype.itemsize
                    + w2_p.size * w2_p.dtype.itemsize
                    + b1_p.size * 4 + b2_p.size * 4)
    if weight_bytes > _MAX_RESIDENT_WEIGHT_BYTES:
        raise ValueError(
            "Resident-weight MLP kernel: weights exceed the VMEM budget "
            "(needs a contraction-dim grid axis with an f32 accumulator).")

    tm = _choose_batch_tile(batch)
    bp = _round_up(batch, tm)
    if bp != batch:
        # Only hit when batch isn't a multiple of the tile; fuses under jit.
        x = jnp.pad(x, ((0, bp - batch), (0, 0)))
    grid = (bp // tm,)

    # Advisory cost estimate so XLA schedules the custom call sensibly.
    flops = 2 * bp * (features * hp + hp * outcomes)
    bytes_accessed = (bp * features * 4 + weight_bytes
                      + bp * outcomes * 4 + bp * 4)
    cost = pl.CostEstimate(flops=flops, transcendentals=0,
                           bytes_accessed=bytes_accessed)

    # VMEM budget: default pipelining double-buffers every operand; the
    # hidden activation intermediate is ~tm*hp f32.  Small (25%) headroom,
    # capped below v7x's 64 MiB physical / ~32 MiB scoped default.
    tile_bytes = tm * features * 4 + tm * outcomes * 4 + tm * 4
    vmem_needed = 2 * (weight_bytes + tile_bytes) + 2 * tm * hp * 4
    vmem_limit = int(min(max(vmem_needed * 5 // 4, 4 << 20), 48 << 20))

    logits, preds = pl.pallas_call(
        _mlp_kernel,
        out_shape=(jax.ShapeDtypeStruct((bp, outcomes), jnp.float32),
                   jax.ShapeDtypeStruct((bp, 1), jnp.int32)),
        grid_spec=pltpu.PrefetchScalarGridSpec(
            num_scalar_prefetch=0,
            grid=grid,
            in_specs=[
                pl.BlockSpec((tm, features), lambda i: (i, 0)),  # x: batch tile
                pl.BlockSpec((features, hp), lambda i: (0, 0)),  # W1: resident
                pl.BlockSpec((1, hp), lambda i: (0, 0)),         # b1: resident
                pl.BlockSpec((hp, outcomes), lambda i: (0, 0)),  # W2: resident
                pl.BlockSpec((1, outcomes), lambda i: (0, 0)),   # b2: resident
            ],
            out_specs=[
                pl.BlockSpec((tm, outcomes), lambda i: (i, 0)),  # logits (unpadded)
                pl.BlockSpec((tm, 1), lambda i: (i, 0)),         # fused argmax
            ],
        ),
        compiler_params=pltpu.CompilerParams(
            dimension_semantics=("parallel",),   # megacore-shardable on v7x
            vmem_limit_bytes=vmem_limit),
        cost_estimate=cost,
    )(x, w1_p, b1_p, w2_p, b2_p)

    # No-op slices when batch divides the tile; removed by XLA under jit.
    return logits[:batch], preds[:batch, 0]


@jax.jit
def mlp_forward(x, w1_p, b1_p, w2_p, b2_p):
    """(batch, features) f32 -> (batch, outcomes) f32 logits."""
    logits, _ = _mlp_pallas(x, w1_p, b1_p, w2_p, b2_p)
    return logits


@jax.jit
def predict(x, w1_p, b1_p, w2_p, b2_p):
    """BaseTorchModel.predict: argmax over dim=1, fused into the kernel."""
    _, preds = _mlp_pallas(x, w1_p, b1_p, w2_p, b2_p)
    return preds


def forward(X, params):
    # BaseTorchModel.forward accepts python lists; convert outside jit.
    if isinstance(X, list):
        X = jnp.asarray(X, dtype=jnp.float32)
    return mlp_forward(X, *params)


if __name__ == "__main__":
    # Deterministic small problem; batch spans two tiles so the grid has >1
    # step and the resident-weight / parallel-batch path is exercised.
    batch, features, hidden, outcomes = 256, 32, 64, 8

    key = jax.random.PRNGKey(0)
    kx, kw1, kb1, kw2, kb2 = jax.random.split(key, 5)

    x = jax.random.normal(kx, (batch, features), dtype=jnp.float32)
    # Deterministic "init" of parameters (synthetic, not a checkpoint load).
    w1 = jax.random.normal(kw1, (features, hidden), dtype=jnp.float32) * 0.1
    b1 = jax.random.normal(kb1, (1, hidden), dtype=jnp.float32) * 0.01
    w2 = jax.random.normal(kw2, (hidden, outcomes), dtype=jnp.float32) * 0.1
    b2 = jax.random.normal(kb2, (1, outcomes), dtype=jnp.float32) * 0.01

    # Model-setup time: pad/cast parameters ONCE (hoisted out of hot path).
    params = prepare_params(w1, b1, w2, b2)
    jax.block_until_ready(params)

    logits = mlp_forward(x, *params)
    jax.block_until_ready(logits)
    assert logits.shape == (batch, outcomes)

    # Reference in plain JAX with the same bf16-input / f32-accumulate math
    # (matches PyTorch Linear/ReLU/Linear up to bf16 input rounding).
    x_b, w1_b, w2_b = (x.astype(jnp.bfloat16), w1.astype(jnp.bfloat16),
                       w2.astype(jnp.bfloat16))
    h_ref = jnp.maximum(
        jnp.dot(x_b, w1_b, preferred_element_type=jnp.float32) + b1, 0.0)
    ref = jnp.dot(h_ref.astype(jnp.bfloat16), w2_b,
                  preferred_element_type=jnp.float32) + b2
    assert jnp.allclose(logits, ref, atol=1e-2, rtol=1e-2)

    preds = predict(x, *params)
    jax.block_until_ready(preds)
    assert preds.shape == (batch,)
    assert jnp.array_equal(preds, jnp.argmax(ref, axis=1))

    # list-input path of BaseTorchModel.forward
    logits_list = forward(x[:4].tolist(), params)
    assert jnp.allclose(logits_list, logits[:4], atol=1e-2, rtol=1e-2)

    # TODO(synk): BaseTorchModel.fit (Adam optimizer loop, dataloader,
    # TrainingLoopPlot) is host-side training logic with no Pallas-kernel
    # equivalent; only forward/predict are implemented.
    print("KERNEL_OK")
</pallas_src>

<mosaic_0001>
module attributes {stable_mosaic.version = 11 : i64} {
  func.func @_mlp_kernel(%arg0: i32, %arg1: memref<128x32xf32, #tpu.memory_space<vmem>>, %arg2: memref<32x128xbf16, #tpu.memory_space<vmem>>, %arg3: memref<1x128xf32, #tpu.memory_space<vmem>>, %arg4: memref<128x8xbf16, #tpu.memory_space<vmem>>, %arg5: memref<1x8xf32, #tpu.memory_space<vmem>>, %arg6: memref<128x8xf32, #tpu.memory_space<vmem>>, %arg7: memref<128x1xi32, #tpu.memory_space<vmem>>) attributes {dimension_semantics = [#tpu.dimension_semantics<parallel>], iteration_bounds = array<i64: 2>, scalar_prefetch = 0 : i64, scratch_operands = 0 : i64, tpu.core_type = #tpu.core_type<tc>, window_params = [{transform_indices = @transform_0, window_bounds = array<i64: 128, 32>}, {pipeline_mode = #tpu.pipeline_mode<synchronous>, transform_indices = @transform_1, window_bounds = array<i64: 32, 128>}, {pipeline_mode = #tpu.pipeline_mode<synchronous>, transform_indices = @transform_2, window_bounds = array<i64: 1, 128>}, {pipeline_mode = #tpu.pipeline_mode<synchronous>, transform_indices = @transform_3, window_bounds = array<i64: 128, 8>}, {pipeline_mode = #tpu.pipeline_mode<synchronous>, transform_indices = @transform_4, window_bounds = array<i64: 1, 8>}, {transform_indices = @transform_5, window_bounds = array<i64: 128, 8>}, {transform_indices = @transform_6, window_bounds = array<i64: 128, 1>}]} {
    %c0 = arith.constant 0 : index
    %c0_0 = arith.constant 0 : index
    %0 = vector.load %arg1[%c0, %c0_0] : memref<128x32xf32, #tpu.memory_space<vmem>>, vector<128x32xf32>
    %1 = arith.truncf %0 : vector<128x32xf32> to vector<128x32xbf16>
    %c0_1 = arith.constant 0 : index
    %c0_2 = arith.constant 0 : index
    %2 = vector.load %arg2[%c0_1, %c0_2] : memref<32x128xbf16, #tpu.memory_space<vmem>>, vector<32x128xbf16>
    %cst = arith.constant dense<0.000000e+00> : vector<128x128xf32>
    %3 = tpu.matmul %1, %2, %cst {dimension_numbers = #tpu.dot_dimension_numbers<[1], [0], [0], [1], [0, 0, 1, 1], [], []>} : vector<128x32xbf16>, vector<32x128xbf16>, vector<128x128xf32> -> vector<128x128xf32>
    %c0_3 = arith.constant 0 : index
    %c0_4 = arith.constant 0 : index
    %4 = vector.load %arg3[%c0_3, %c0_4] : memref<1x128xf32, #tpu.memory_space<vmem>>, vector<1x128xf32>
    %5 = vector.broadcast %4 : vector<1x128xf32> to vector<128x128xf32>
    %6 = arith.addf %3, %5 : vector<128x128xf32>
    %cst_5 = arith.constant 0.000000e+00 : f32
    %7 = vector.broadcast %cst_5 : f32 to vector<128x128xf32>
    %8 = arith.maximumf %6, %7 : vector<128x128xf32>
    %9 = arith.truncf %8 : vector<128x128xf32> to vector<128x128xbf16>
    %c0_6 = arith.constant 0 : index
    %c0_7 = arith.constant 0 : index
    %10 = vector.load %arg4[%c0_6, %c0_7] : memref<128x8xbf16, #tpu.memory_space<vmem>>, vector<128x8xbf16>
    %cst_8 = arith.constant dense<0.000000e+00> : vector<128x8xf32>
    %11 = tpu.matmul %9, %10, %cst_8 {dimension_numbers = #tpu.dot_dimension_numbers<[1], [0], [0], [1], [0, 0, 1, 1], [], []>} : vector<128x128xbf16>, vector<128x8xbf16>, vector<128x8xf32> -> vector<128x8xf32>
    %c0_9 = arith.constant 0 : index
    %c0_10 = arith.constant 0 : index
    %12 = vector.load %arg5[%c0_9, %c0_10] : memref<1x8xf32, #tpu.memory_space<vmem>>, vector<1x8xf32>
    %13 = vector.broadcast %12 : vector<1x8xf32> to vector<128x8xf32>
    %14 = arith.addf %11, %13 : vector<128x8xf32>
    %c0_11 = arith.constant 0 : index
    %c0_12 = arith.constant 0 : index
    %15 = vector.load %arg6[%c0_11, %c0_12] : memref<128x8xf32, #tpu.memory_space<vmem>>, vector<128x8xf32>
    tpu.vector_store %arg6[%c0_11, %c0_12], %14 {strides = array<i32>} : memref<128x8xf32, #tpu.memory_space<vmem>>, vector<128x8xf32>,
    %16 = tpu.iota {dimensions = array<i32: 1>} : vector<128x8xi32>
    %cst_13 = arith.constant dense<0xFF800000> : vector<128xf32>
    %17 = vector.multi_reduction <maximumf>, %14, %cst_13 [1] : vector<128x8xf32> to vector<128xf32>
    %18 = vector.shape_cast %17 : vector<128xf32> to vector<128x1xf32>
    %19 = vector.broadcast %18 : vector<128x1xf32> to vector<128x8xf32>
    %20 = arith.cmpf oeq, %14, %19 : vector<128x8xf32>
    %c8_i32 = arith.constant 8 : i32
    %21 = vector.broadcast %c8_i32 : i32 to vector<128x8xi32>
    %22 = arith.select %20, %16, %21 : vector<128x8xi1>, vector<128x8xi32>
    %cst_14 = arith.constant dense<2147483647> : vector<128xi32>
    %23 = vector.multi_reduction <minsi>, %22, %cst_14 [1] : vector<128x8xi32> to vector<128xi32>
    %24 = vector.shape_cast %23 : vector<128xi32> to vector<128x1xi32>
    %c0_15 = arith.constant 0 : index
    %c0_16 = arith.constant 0 : index
    %25 = vector.load %arg7[%c0_15, %c0_16] : memref<128x1xi32, #tpu.memory_space<vmem>>, vector<128x1xi32>
    tpu.vector_store %arg7[%c0_15, %c0_16], %24 {strides = array<i32>} : memref<128x1xi32, #tpu.memory_space<vmem>>, vector<128x1xi32>,
    return
  }
  func.func @transform_0(%arg0: i32) -> (i32, i32) {
    %c0_i32 = arith.constant 0 : i32
    %c0_i32_0 = arith.constant 0 : i32
    return %arg0, %c0_i32 : i32, i32
  }
  func.func @transform_1(%arg0: i32) -> (i32, i32) {
    %c0_i32 = arith.constant 0 : i32
    %c0_i32_0 = arith.constant 0 : i32
    %c0_i32_1 = arith.constant 0 : i32
    return %c0_i32, %c0_i32_0 : i32, i32
  }
  func.func @transform_2(%arg0: i32) -> (i32, i32) {
    %c0_i32 = arith.constant 0 : i32
    %c0_i32_0 = arith.constant 0 : i32
    %c0_i32_1 = arith.constant 0 : i32
    return %c0_i32, %c0_i32_0 : i32, i32
  }
  func.func @transform_3(%arg0: i32) -> (i32, i32) {
    %c0_i32 = arith.constant 0 : i32
    %c0_i32_0 = arith.constant 0 : i32
    %c0_i32_1 = arith.constant 0 : i32
    return %c0_i32, %c0_i32_0 : i32, i32
  }
  func.func @transform_4(%arg0: i32) -> (i32, i32) {
    %c0_i32 = arith.constant 0 : i32
    %c0_i32_0 = arith.constant 0 : i32
    %c0_i32_1 = arith.constant 0 : i32
    return %c0_i32, %c0_i32_0 : i32, i32
  }
  func.func @transform_5(%arg0: i32) -> (i32, i32) {
    %c0_i32 = arith.constant 0 : i32
    %c0_i32_0 = arith.constant 0 : i32
    return %arg0, %c0_i32 : i32, i32
  }
  func.func @transform_6(%arg0: i32) -> (i32, i32) {
    %c0_i32 = arith.constant 0 : i32
    %c0_i32_0 = arith.constant 0 : i32
    return %arg0, %c0_i32 : i32, i32
  }
}

</mosaic_0001>

<llo_original>
// kernel: mlp_forward.1
$region0: #{mlp_forward.1}
  #allocation0 [shape = 'u32[]', space=smem, size = 0x4, offset = 0x4, fixed_abs, tag = 'smem constant byte address 0x4 - core index']
  #allocation1 [shape = 'u32[72,128]{1,0:T(1,128)}', space=vmem, size = 0x9000, scoped, tag = 'internal scratch']
  %s0 = inlined_call_operand.vmem [shape: f32[256,32], index: 0, kind: input, shape index: {}]
  %s1 = inlined_call_operand.vmem [shape: bf16[32,128], index: 1, kind: input, shape index: {}]
  %s2 = inlined_call_operand.vmem [shape: f32[1,128], index: 2, kind: input, shape index: {}]
  %s3 = inlined_call_operand.vmem [shape: bf16[128,8], index: 3, kind: input, shape index: {}]
  %s4 = inlined_call_operand.vmem [shape: f32[1,8], index: 4, kind: input, shape index: {}]
  %s5 = inlined_call_operand.vmem [shape: f32[256,8], index: 5, kind: output, shape index: {0}]
  %s6 = inlined_call_operand.hbm [shape: s32[256,1], index: 6, kind: output, shape index: {1}]
  %7 = xla_tuple %s5, %s6
  %s8 = sld [smem:[#allocation0]]
  $region61: #{mlp_forward.1} parent=0
    _
  %s10 = ssub.s32 1, %s8
  %s11 = scalar_select 0, %s10, %s8
  $region1: #{mlp_forward.1} parent=0
    #allocation2 [shape = 'u8[131072]{0}', space=vmem, size = 0x20000, scoped, tag = 'output window, operand 1']
    #allocation3 [shape = 's32[2]{0}', space=sflag, size = 0x8, scoped, tag = 'scoped memory for mlp_forward.1']
    %12 = vsyncpa [#allocation3], 0
    %s13 = scalar_lea.sflag [#allocation3], 1
    %14 = vsyncpa %s13, 0
    loop: start=0, step=1, limit=4
    $region2: #{mlp_forward.1} parent=1 // loop_pre_header
      _
    $region3: #{mlp_forward.1} parent=1 // loop_header
      %s16 = sphi 0, %s20
      %p17 = scmp.ge.s32.totalorder %s16, 4
      %s26 = sphi 0, %s28
      %s29 = sphi 0, %s26
      %s30 = sphi 0, %s29
      %s46 = sphi 0, %s30
      %s50 = sphi 0, %s50
      %s52 = sphi 0, %s50
      %s53 = sphi 0, %s52
      %s67 = sphi 0, %s53
      %s71 = sphi 0, %s71
      %s73 = sphi 0, %s71
      %s74 = sphi 0, %s73
      %s88 = sphi 0, %s74
      %s92 = sphi 0, %s92
      %s94 = sphi 0, %s92
      %s95 = sphi 0, %s94
      %s109 = sphi 0, %s95
      %s113 = sphi 0, %s113
      %s115 = sphi 0, %s113
      %s116 = sphi 0, %s115
      %s130 = sphi 0, %s116
      %s136 = sphi 0, %s138
      %s139 = sphi 0, %s136
      %s140 = sphi 0, %s139
      %s156 = sphi 0, %s140
      %s162 = sphi 0, %s164
      %s165 = sphi 0, %s162
      %s166 = sphi 0, %s165
      %s182 = sphi 0, %s166
    $region4: #{mlp_forward.1} parent=1 // loop_header_branch
      %19 = sbr.rel (%p17) target = $region8
    $region5: #{mlp_forward.1} parent=1 // loop_body
      %s21 = ssub.s32 %s16, 1
      %s22 = ssub.s32 %s16, 2
      %s23 = sadd.s32 %s16, 1
      %s24 = ssub.s32 %s16, %s23
      %p25 = scmp.eq.s32.totalorder %s24, 0
      %s27 = sadd.s32 %s26, 1
      %s28 = scalar_select %p25, %s26, %s27
      %p31 = pneg %p25
      %p32 = scmp.eq.s32.totalorder %s16, 1
      %p33 = por %p31, %p32
      %p34 = scmp.ne.s32.totalorder %s26, %s29
      %p35 = scmp.eq.s32.totalorder %s16, 0
      %p36 = por %p34, %p35
      %p37 = scmp.ne.s32.totalorder %s26, %s29
      %p38 = scmp.eq.s32.totalorder %s21, 1
      %p39 = por %p37, %p38
      %p40 = scmp.ne.s32.totalorder %s29, %s30
      %p41 = scmp.eq.s32.totalorder %s21, 0
      %p42 = por %p40, %p41
      %p43 = scmp.ne.s32.totalorder %s29, %s30
      %p44 = scmp.eq.s32.totalorder %s22, 1
      %p45 = por %p43, %p44
      %p47 = scmp.ne.s32.totalorder %s30, %s46
      %p48 = scmp.eq.s32.totalorder %s22, 0
      %p49 = por %p47, %p48
      %s51 = sadd.s32 %s50, 1
      %p54 = scmp.eq.s32.totalorder %s16, 1
      %p55 = scmp.ne.s32.totalorder %s50, %s52
      %p56 = scmp.eq.s32.totalorder %s16, 0
      %p57 = por %p55, %p56
      %p58 = scmp.ne.s32.totalorder %s50, %s52
      %p59 = scmp.eq.s32.totalorder %s21, 1
      %p60 = por %p58, %p59
      %p61 = scmp.ne.s32.totalorder %s52, %s53
      %p62 = scmp.eq.s32.totalorder %s21, 0
      %p63 = por %p61, %p62
      %p64 = scmp.ne.s32.totalorder %s52, %s53
      %p65 = scmp.eq.s32.totalorder %s22, 1
      %p66 = por %p64, %p65
      %p68 = scmp.ne.s32.totalorder %s53, %s67
      %p69 = scmp.eq.s32.totalorder %s22, 0
      %p70 = por %p68, %p69
      %s72 = sadd.s32 %s71, 1
      %p75 = scmp.eq.s32.totalorder %s16, 1
      %p76 = scmp.ne.s32.totalorder %s71, %s73
      %p77 = scmp.eq.s32.totalorder %s16, 0
      %p78 = por %p76, %p77
      %p79 = scmp.ne.s32.totalorder %s71, %s73
      %p80 = scmp.eq.s32.totalorder %s21, 1
      %p81 = por %p79, %p80
      %p82 = scmp.ne.s32.totalorder %s73, %s74
      %p83 = scmp.eq.s32.totalorder %s21, 0
      %p84 = por %p82, %p83
      %p85 = scmp.ne.s32.totalorder %s73, %s74
      %p86 = scmp.eq.s32.totalorder %s22, 1
      %p87 = por %p85, %p86
      %p89 = scmp.ne.s32.totalorder %s74, %s88
      %p90 = scmp.eq.s32.totalorder %s22, 0
      %p91 = por %p89, %p90
      %s93 = sadd.s32 %s92, 1
      %p96 = scmp.eq.s32.totalorder %s16, 1
      %p97 = scmp.ne.s32.totalorder %s92, %s94
      %p98 = scmp.eq.s32.totalorder %s16, 0
      %p99 = por %p97, %p98
      %p100 = scmp.ne.s32.totalorder %s92, %s94
      %p101 = scmp.eq.s32.totalorder %s21, 1
      %p102 = por %p100, %p101
      %p103 = scmp.ne.s32.totalorder %s94, %s95
      %p104 = scmp.eq.s32.totalorder %s21, 0
      %p105 = por %p103, %p104
      %p106 = scmp.ne.s32.totalorder %s94, %s95
      %p107 = scmp.eq.s32.totalorder %s22, 1
      %p108 = por %p106, %p107
      %p110 = scmp.ne.s32.totalorder %s95, %s109
      %p111 = scmp.eq.s32.totalorder %s22, 0
      %p112 = por %p110, %p111
      %s114 = sadd.s32 %s113, 1
      %p117 = scmp.eq.s32.totalorder %s16, 1
      %p118 = scmp.ne.s32.totalorder %s113, %s115
      %p119 = scmp.eq.s32.totalorder %s16, 0
      %p120 = por %p118, %p119
      %p121 = scmp.ne.s32.totalorder %s113, %s115
      %p122 = scmp.eq.s32.totalorder %s21, 1
      %p123 = por %p121, %p122
      %p124 = scmp.ne.s32.totalorder %s115, %s116
      %p125 = scmp.eq.s32.totalorder %s21, 0
      %p126 = por %p124, %p125
      %p127 = scmp.ne.s32.totalorder %s115, %s116
      %p128 = scmp.eq.s32.totalorder %s22, 1
      %p129 = por %p127, %p128
      %p131 = scmp.ne.s32.totalorder %s116, %s130
      %p132 = scmp.eq.s32.totalorder %s22, 0
      %p133 = por %p131, %p132
      %s134 = ssub.s32 %s16, %s23
      %p135 = scmp.eq.s32.totalorder %s134, 0
      %s137 = sadd.s32 %s136, 1
      %s138 = scalar_select %p135, %s136, %s137
      %p141 = pneg %p135
      %p142 = scmp.eq.s32.totalorder %s16, 1
      %p143 = por %p141, %p142
      %p144 = scmp.ne.s32.totalorder %s136, %s139
      %p145 = scmp.eq.s32.totalorder %s16, 0
      %p146 = por %p144, %p145
      %p147 = scmp.ne.s32.totalorder %s136, %s139
      %p148 = scmp.eq.s32.totalorder %s21, 1
      %p149 = por %p147, %p148
      %p150 = scmp.ne.s32.totalorder %s139, %s140
      %p151 = scmp.eq.s32.totalorder %s21, 0
      %p152 = por %p150, %p151
      %p153 = scmp.ne.s32.totalorder %s139, %s140
      %p154 = scmp.eq.s32.totalorder %s22, 1
      %p155 = por %p153, %p154
      %p157 = scmp.ne.s32.totalorder %s140, %s156
      %p158 = scmp.eq.s32.totalorder %s22, 0
      %p159 = por %p157, %p158
      %s160 = ssub.s32 %s16, %s23
      %p161 = scmp.eq.s32.totalorder %s160, 0
      %s163 = sadd.s32 %s162, 1
      %s164 = scalar_select %p161, %s162, %s163
      %p167 = pneg %p161
      %p168 = scmp.eq.s32.totalorder %s16, 1
      %p169 = por %p167, %p168
      %p170 = scmp.ne.s32.totalorder %s162, %s165
      %p171 = scmp.eq.s32.totalorder %s16, 0
      %p172 = por %p170, %p171
      %p173 = scmp.ne.s32.totalorder %s162, %s165
      %p174 = scmp.eq.s32.totalorder %s21, 1
      %p175 = por %p173, %p174
      %p176 = scmp.ne.s32.totalorder %s165, %s166
      %p177 = scmp.eq.s32.totalorder %s21, 0
      %p178 = por %p176, %p177
      %p179 = scmp.ne.s32.totalorder %s165, %s166
      %p180 = scmp.eq.s32.totalorder %s22, 1
      %p181 = por %p179, %p180
      %p183 = scmp.ne.s32.totalorder %s166, %s182
      %p184 = scmp.eq.s32.totalorder %s22, 0
      %p185 = por %p183, %p184
      %p186 = scmp.le.s32.totalorder 1, %s16
      %p187 = scmp.lt.s32.totalorder %s16, 3
      %p188 = pnand %p186, %p187
      %p189 = pneg %p188
      // Predicated region
      $region9: #{mlp_forward.1} parent=5 // pred_check
        _
      $region10: #{mlp_forward.1} parent=5 // pred_check_branch
        %191 = sbr.rel (%p188) target = $region12
      $region11: #{mlp_forward.1} parent=5 // pred_region
        %s192 = ssub.s32 %s16, 1
        // Predicated region
        $region13: #{mlp_forward.1} parent=11 // pred_check
          %p193 = pneg %p63
        $region14: #{mlp_forward.1} parent=11 // pred_check_branch
          %195 = sbr.rel (%p193) target = $region16
        $region15: #{mlp_forward.1} parent=11 // pred_region
          _
        $region16: #{mlp_forward.1} parent=11 // pred_fallthru
          _
        // Predicated region
        $region17: #{mlp_forward.1} parent=11 // pred_check
          %p196 = pneg %p84
        $region18: #{mlp_forward.1} parent=11 // pred_check_branch
          %198 = sbr.rel (%p196) target = $region20
        $region19: #{mlp_forward.1} parent=11 // pred_region
          _
        $region20: #{mlp_forward.1} parent=11 // pred_fallthru
          _
        // Predicated region
        $region21: #{mlp_forward.1} parent=11 // pred_check
          %p199 = pneg %p105
        $region22: #{mlp_forward.1} parent=11 // pred_check_branch
          %201 = sbr.rel (%p199) target = $region24
        $region23: #{mlp_forward.1} parent=11 // pred_region
          _
        $region24: #{mlp_forward.1} parent=11 // pred_fallthru
          _
        // Predicated region
        $region25: #{mlp_forward.1} parent=11 // pred_check
          %p202 = pneg %p126
        $region26: #{mlp_forward.1} parent=11 // pred_check_branch
          %204 = sbr.rel (%p202) target = $region28
        $region27: #{mlp_forward.1} parent=11 // pred_region
          _
        $region28: #{mlp_forward.1} parent=11 // pred_fallthru
          _
      $region12: #{mlp_forward.1} parent=5 // pred_fallthru
        _
      %p205 = scmp.lt.s32.totalorder %s16, 2
      // Predicated region
      $region29: #{mlp_forward.1} parent=5 // pred_check
        %p206 = pneg %p205
      $region30: #{mlp_forward.1} parent=5 // pred_check_branch
        %208 = sbr.rel (%p206) target = $region32
      $region31: #{mlp_forward.1} parent=5 // pred_region
        // Predicated region
        $region33: #{mlp_forward.1} parent=31 // pred_check
          %p209 = pneg %p36
        $region34: #{mlp_forward.1} parent=31 // pred_check_branch
          %211 = sbr.rel (%p209) target = $region36
        $region35: #{mlp_forward.1} parent=31 // pred_region
          %s212 = smul.u32 16, %s16
          %p213 = scmp.lt.s32.totalorder %s212, 31
          %s214 = scalar_select %p213, %s212, 31
          %s215 = smul.addr %s214, 8
          %s216 = scalar_lea.vmem %s0, %s215
          %s217 = smul.u32 16, %s16
        $region36: #{mlp_forward.1} parent=31 // pred_fallthru
          _
      $region32: #{mlp_forward.1} parent=5 // pred_fallthru
        _
      %p218 = scmp.le.s32.totalorder 1, %s16
      %p219 = scmp.lt.s32.totalorder %s16, 3
      %p220 = pnand %p218, %p219
      %p221 = pneg %p220
      // Predicated region
      $region37: #{mlp_forward.1} parent=5 // pred_check
        _
      $region38: #{mlp_forward.1} parent=5 // pred_check_branch
        %223 = sbr.rel (%p220) target = $region40
      $region39: #{mlp_forward.1} parent=5 // pred_region
        %s224 = ssub.s32 %s16, 1
        %s225 = smul.u32 16, %s21
        %p226 = scmp.lt.s32.totalorder %s225, 31
        %s227 = scalar_select %p226, %s225, 31
        %s228 = smul.addr %s227, 8
        %s229 = scalar_lea.vmem %s0, %s228
        %p230 = pneg %p42
        %p231 = pneg %p39
        %p232 = pneg %p63
        %p233 = pneg %p60
        %p234 = pneg %p84
        %p235 = pneg %p81
        %p236 = pneg %p105
        %p237 = pneg %p102
        %p238 = pneg %p126
        %p239 = pneg %p123
        %p240 = pneg %p152
        %p241 = pneg %p149
        %s242 = smul.u32 16, %s21
        %p243 = scmp.lt.s32.totalorder %s242, 31
        %s244 = scalar_select %p243, %s242, 31
        %s245 = smul.addr %s244, 8
        %s246 = scalar_lea.vmem %s5, %s245
        %p247 = pneg %p178
        %p248 = pneg %p175
        %s249 = sand.u32 %s165, 1
        %s250 = scalar_lea.sflag [#allocation3], %s249
        %s251 = sand.u32 %s165, 1
        %s252 = smul.addr %s251, 128
        %s253 = scalar_lea.vmem [#allocation2], %s252
        %s254 = smul.u32 16, %s21
        %p255 = scmp.lt.s32.totalorder %s254, 31
        %s256 = scalar_select %p255, %s254, 31
        %s257 = smul.addr %s256, 8
        %s258 = scalar_lea.vmem %s0, %s257
        %s259 = smul.u32 16, %s21
        %s260 = smul.u32 16, %s21
        %p261 = scmp.lt.s32.totalorder %s260, 31
        %s262 = scalar_select %p261, %s260, 31
        %s263 = smul.addr %s262, 8
        %s264 = scalar_lea.vmem %s5, %s263
        %s265 = smul.u32 16, %s21
        %s266 = smul.u32 16, %s21
        %v268 = vld [vmem:[%s258] sm:$0xff]
        %v269 = vld [vmem:[%s258 + $0x8] sm:$0xff]
        %v270 = vld [vmem:[%s258 + $0x10] sm:$0xff]
        %v271 = vld [vmem:[%s258 + $0x18] sm:$0xff]
        %v272 = vld [vmem:[%s258 + $0x20] sm:$0xff]
        %v273 = vld [vmem:[%s258 + $0x28] sm:$0xff]
        %v274 = vld [vmem:[%s258 + $0x30] sm:$0xff]
        %v275 = vld [vmem:[%s258 + $0x38] sm:$0xff]
        %v276 = vld [vmem:[%s258 + $0x40] sm:$0xff]
        %v277 = vld [vmem:[%s258 + $0x48] sm:$0xff]
        %v278 = vld [vmem:[%s258 + $0x50] sm:$0xff]
        %v279 = vld [vmem:[%s258 + $0x58] sm:$0xff]
        %v280 = vld [vmem:[%s258 + $0x60] sm:$0xff]
        %v281 = vld [vmem:[%s258 + $0x68] sm:$0xff]
        %v282 = vld [vmem:[%s258 + $0x70] sm:$0xff]
        %v283 = vld [vmem:[%s258 + $0x78] sm:$0xff]
        %v284 = vpack.c.bf16 %v269, %v268
        %v285 = vpack.c.bf16 %v271, %v270
        %v286 = vpack.c.bf16 %v273, %v272
        %v287 = vpack.c.bf16 %v275, %v274
        %v288 = vpack.c.bf16 %v277, %v276
        %v289 = vpack.c.bf16 %v279, %v278
        %v290 = vpack.c.bf16 %v281, %v280
        %v291 = vpack.c.bf16 %v283, %v282
        %v292 = vld [vmem:[%s1] sm:$0xf]
        %v293 = vld [vmem:[%s1 + $0x4] sm:$0xf]
        %v294 = vld [vmem:[%s1 + $0x8] sm:$0xf]
        %v295 = vld [vmem:[%s1 + $0xc] sm:$0xf]
        %v296 = vld [vmem:[%s2] sm:$0x1]
        %v298 = vperm.slane %v296, 0
        %v304 = vunpack.c.l.b16 %v292
        %v305 = vunpack.c.l.b16 %v293
        %v306 = vunpack.c.l.b16 %v294
        %v307 = vunpack.c.l.b16 %v295
        %v308 = vpack.c.b16 %v305, %v304
        %v309 = vpack.c.b16 %v307, %v306
        %vm312 = vcmask 261120
        %v314 = vsel %vm312, %v284, 0
        %v317 = vsel %vm312, %v285, 0
        %v320 = vsel %vm312, %v286, 0
        %v323 = vsel %vm312, %v287, 0
        %v326 = vsel %vm312, %v288, 0
        %v329 = vsel %vm312, %v289, 0
        %v332 = vsel %vm312, %v290, 0
        %v335 = vsel %vm312, %v291, 0
        %337 = vmatpush.bf16.msra.mxu0 0
        %338 = vmatpush.bf16.msra.mxu0 0
        %339 = vmatpush.bf16.msra.mxu0 0
        %340 = vmatpush.bf16.msra.mxu0 0
        %341 = vmatpush.bf16.msra.mxu0 0
        %342 = vmatpush.bf16.msra.mxu0 0
        %343 = vmatpush.bf16.msra.mxu0 %v309
        %344 = vmatpush.bf16.msra.mxu0 %v308
        %345 = vmatmul.bf16.gmra.mxu0 %v314
        %v346 = vpop.f32.mrf.mxu0
        %v347 = vadd.f32 %v298, %v346
        %v348 = vpop.f32.mrf.mxu0
        %v349 = vadd.f32 %v298, %v348
        %350 = vmatmul.bf16.gmra.mxu0 %v317
        %v351 = vpop.f32.mrf.mxu0
        %v352 = vadd.f32 %v298, %v351
        %v353 = vpop.f32.mrf.mxu0
        %v354 = vadd.f32 %v298, %v353
        %355 = vmatmul.bf16.gmra.mxu0 %v320
        %v356 = vpop.f32.mrf.mxu0
        %v357 = vadd.f32 %v298, %v356
        %v358 = vpop.f32.mrf.mxu0
        %v359 = vadd.f32 %v298, %v358
        %360 = vmatmul.bf16.gmra.mxu0 %v323
        %v361 = vpop.f32.mrf.mxu0
        %v362 = vadd.f32 %v298, %v361
        %v363 = vpop.f32.mrf.mxu0
        %v364 = vadd.f32 %v298, %v363
        %365 = vmatmul.bf16.gmra.mxu0 %v326
        %v366 = vpop.f32.mrf.mxu0
        %v367 = vadd.f32 %v298, %v366
        %v368 = vpop.f32.mrf.mxu0
        %v369 = vadd.f32 %v298, %v368
        %370 = vmatmul.bf16.gmra.mxu0 %v329
        %v371 = vpop.f32.mrf.mxu0
        %v372 = vadd.f32 %v298, %v371
        %v373 = vpop.f32.mrf.mxu0
        %v374 = vadd.f32 %v298, %v373
        %375 = vmatmul.bf16.gmra.mxu0 %v332
        %v376 = vpop.f32.mrf.mxu0
        %v377 = vadd.f32 %v298, %v376
        %v378 = vpop.f32.mrf.mxu0
        %v379 = vadd.f32 %v298, %v378
        %380 = vmatmul.bf16.gmra.mxu0 %v335
        %v381 = vpop.f32.mrf.mxu0
        %v382 = vadd.f32 %v298, %v381
        %v383 = vpop.f32.mrf.mxu0
        %v384 = vadd.f32 %v298, %v383
        %385 = vdwg.mxu0
        %v386 = vmax.f32 %v347, 0.0
        %v387 = vmax.f32 %v349, 0.0
        %v388 = vmax.f32 %v352, 0.0
        %v389 = vmax.f32 %v354, 0.0
        %v390 = vmax.f32 %v357, 0.0
        %v391 = vmax.f32 %v359, 0.0
        %v392 = vmax.f32 %v362, 0.0
        %v393 = vmax.f32 %v364, 0.0
        %v394 = vmax.f32 %v367, 0.0
        %v395 = vmax.f32 %v369, 0.0
        %v396 = vmax.f32 %v372, 0.0
        %v397 = vmax.f32 %v374, 0.0
        %v398 = vmax.f32 %v377, 0.0
        %v399 = vmax.f32 %v379, 0.0
        %v400 = vmax.f32 %v382, 0.0
        %v401 = vmax.f32 %v384, 0.0
        %v402 = vpack.c.bf16 %v387, %v386
        %v403 = vpack.c.bf16 %v389, %v388
        %v404 = vpack.c.bf16 %v391, %v390
        %v405 = vpack.c.bf16 %v393, %v392
        %v406 = vpack.c.bf16 %v395, %v394
        %v407 = vpack.c.bf16 %v397, %v396
        %v408 = vpack.c.bf16 %v399, %v398
        %v409 = vpack.c.bf16 %v401, %v400
        %v410 = vld [vmem:[%s3] sm:$0xf]
        %v411 = vld [vmem:[%s3 + $0x4] sm:$0xf]
        %v412 = vld [vmem:[%s3 + $0x8] sm:$0xf]
        %v413 = vld [vmem:[%s3 + $0xc] sm:$0xf]
        %v414 = vld [vmem:[%s3 + $0x10] sm:$0xf]
        %v415 = vld [vmem:[%s3 + $0x14] sm:$0xf]
        %v416 = vld [vmem:[%s3 + $0x18] sm:$0xf]
        %v417 = vld [vmem:[%s3 + $0x1c] sm:$0xf]
        %v418 = vld [vmem:[%s3 + $0x20] sm:$0xf]
        %v419 = vld [vmem:[%s3 + $0x24] sm:$0xf]
        %v420 = vld [vmem:[%s3 + $0x28] sm:$0xf]
        %v421 = vld [vmem:[%s3 + $0x2c] sm:$0xf]
        %v422 = vld [vmem:[%s3 + $0x30] sm:$0xf]
        %v423 = vld [vmem:[%s3 + $0x34] sm:$0xf]
        %v424 = vld [vmem:[%s3 + $0x38] sm:$0xf]
        %v425 = vld [vmem:[%s3 + $0x3c] sm:$0xf]
        %v426 = vld [vmem:[%s4] sm:$0x1]
        %v428 = vperm.slane %v426, 0
        %v446 = vunpack.c.l.b16 %v410
        %v447 = vunpack.c.l.b16 %v411
        %v448 = vunpack.c.l.b16 %v412
        %v449 = vunpack.c.l.b16 %v413
        %v450 = vunpack.c.l.b16 %v414
        %v451 = vunpack.c.l.b16 %v415
        %v452 = vunpack.c.l.b16 %v416
        %v453 = vunpack.c.l.b16 %v417
        %v454 = vunpack.c.l.b16 %v418
        %v455 = vunpack.c.l.b16 %v419
        %v456 = vunpack.c.l.b16 %v420
        %v457 = vunpack.c.l.b16 %v421
        %v458 = vunpack.c.l.b16 %v422
        %v459 = vunpack.c.l.b16 %v423
        %v460 = vunpack.c.l.b16 %v424
        %v461 = vunpack.c.l.b16 %v425
        %v462 = vpack.c.b16 %v447, %v446
        %v463 = vpack.c.b16 %v449, %v448
        %v464 = vpack.c.b16 %v451, %v450
        %v465 = vpack.c.b16 %v453, %v452
        %v466 = vpack.c.b16 %v455, %v454
        %v467 = vpack.c.b16 %v457, %v456
        %v468 = vpack.c.b16 %v459, %v458
        %v469 = vpack.c.b16 %v461, %v460
        %478 = vmatpush.bf16.msra.mxu0 %v469
        %479 = vmatpush.bf16.msra.mxu0 %v468
        %480 = vmatpush.bf16.msra.mxu0 %v467
        %481 = vmatpush.bf16.msra.mxu0 %v466
        %482 = vmatpush.bf16.msra.mxu0 %v465
        %483 = vmatpush.bf16.msra.mxu0 %v464
        %484 = vmatpush.bf16.msra.mxu0 %v463
        %485 = vmatpush.bf16.msra.mxu0 %v462
        %486 = vmatmul.bf16.gmra.mxu0 %v402
        %v487 = vpop.f32.mrf.mxu0
        %v488 = vadd.f32 %v428, %v487
        %v489 = vpop.f32.mrf.mxu0
        %v490 = vadd.f32 %v428, %v489
        %491 = vmatmul.bf16.gmra.mxu0 %v403
        %v492 = vpop.f32.mrf.mxu0
        %v493 = vadd.f32 %v428, %v492
        %v494 = vpop.f32.mrf.mxu0
        %v495 = vadd.f32 %v428, %v494
        %496 = vmatmul.bf16.gmra.mxu0 %v404
        %v497 = vpop.f32.mrf.mxu0
        %v498 = vadd.f32 %v428, %v497
        %v499 = vpop.f32.mrf.mxu0
        %v500 = vadd.f32 %v428, %v499
        %501 = vmatmul.bf16.gmra.mxu0 %v405
        %v502 = vpop.f32.mrf.mxu0
        %v503 = vadd.f32 %v428, %v502
        %v504 = vpop.f32.mrf.mxu0
        %v505 = vadd.f32 %v428, %v504
        %506 = vmatmul.bf16.gmra.mxu0 %v406
        %v507 = vpop.f32.mrf.mxu0
        %v508 = vadd.f32 %v428, %v507
        %v509 = vpop.f32.mrf.mxu0
        %v510 = vadd.f32 %v428, %v509
        %511 = vmatmul.bf16.gmra.mxu0 %v407
        %v512 = vpop.f32.mrf.mxu0
        %v513 = vadd.f32 %v428, %v512
        %v514 = vpop.f32.mrf.mxu0
        %v515 = vadd.f32 %v428, %v514
        %516 = vmatmul.bf16.gmra.mxu0 %v408
        %v517 = vpop.f32.mrf.mxu0
        %v518 = vadd.f32 %v428, %v517
        %v519 = vpop.f32.mrf.mxu0
        %v520 = vadd.f32 %v428, %v519
        %521 = vmatmul.bf16.gmra.mxu0 %v409
        %v522 = vpop.f32.mrf.mxu0
        %v523 = vadd.f32 %v428, %v522
        %v524 = vpop.f32.mrf.mxu0
        %v525 = vadd.f32 %v428, %v524
        %526 = vdwg.mxu0
        %vm527 = vcmask 64512
        %528 = vst.msk [vmem:[%s264] sm:$0xff] %vm527, %v488
        %529 = vst.msk [vmem:[%s264 + $0x8] sm:$0xff] %vm527, %v490
        %530 = vst.msk [vmem:[%s264 + $0x10] sm:$0xff] %vm527, %v493
        %531 = vst.msk [vmem:[%s264 + $0x18] sm:$0xff] %vm527, %v495
        %532 = vst.msk [vmem:[%s264 + $0x20] sm:$0xff] %vm527, %v498
        %533 = vst.msk [vmem:[%s264 + $0x28] sm:$0xff] %vm527, %v500
        %534 = vst.msk [vmem:[%s264 + $0x30] sm:$0xff] %vm527, %v503
        %535 = vst.msk [vmem:[%s264 + $0x38] sm:$0xff] %vm527, %v505
        %536 = vst.msk [vmem:[%s264 + $0x40] sm:$0xff] %vm527, %v508
        %537 = vst.msk [vmem:[%s264 + $0x48] sm:$0xff] %vm527, %v510
        %538 = vst.msk [vmem:[%s264 + $0x50] sm:$0xff] %vm527, %v513
        %539 = vst.msk [vmem:[%s264 + $0x58] sm:$0xff] %vm527, %v515
        %540 = vst.msk [vmem:[%s264 + $0x60] sm:$0xff] %vm527, %v518
        %541 = vst.msk [vmem:[%s264 + $0x68] sm:$0xff] %vm527, %v520
        %542 = vst.msk [vmem:[%s264 + $0x70] sm:$0xff] %vm527, %v523
        %543 = vst.msk [vmem:[%s264 + $0x78] sm:$0xff] %vm527, %v525
        %v544 = vlaneseq
        %v545 = vand.u32 %v544, 127
        %v546 = vsel %vm527, %v488, -inf
        %547 = vmax.xlane.f32.xlu0 %v546
        %v548 = vpop.xlane.xlu0 %547
        %v549 = vsel %vm527, %v490, -inf
        %550 = vmax.xlane.f32.xlu0 %v549
        %v551 = vpop.xlane.xlu0 %550
        %v552 = vsel %vm527, %v493, -inf
        %553 = vmax.xlane.f32.xlu0 %v552
        %v554 = vpop.xlane.xlu0 %553
        %v555 = vsel %vm527, %v495, -inf
        %556 = vmax.xlane.f32.xlu0 %v555
        %v557 = vpop.xlane.xlu0 %556
        %v558 = vsel %vm527, %v498, -inf
        %559 = vmax.xlane.f32.xlu0 %v558
        %v560 = vpop.xlane.xlu0 %559
        %v561 = vsel %vm527, %v500, -inf
        %562 = vmax.xlane.f32.xlu0 %v561
        %v563 = vpop.xlane.xlu0 %562
        %v564 = vsel %vm527, %v503, -inf
        %565 = vmax.xlane.f32.xlu0 %v564
        %v566 = vpop.xlane.xlu0 %565
        %v567 = vsel %vm527, %v505, -inf
        %568 = vmax.xlane.f32.xlu0 %v567
        %v569 = vpop.xlane.xlu0 %568
        %v570 = vsel %vm527, %v508, -inf
        %571 = vmax.xlane.f32.xlu0 %v570
        %v572 = vpop.xlane.xlu0 %571
        %v573 = vsel %vm527, %v510, -inf
        %574 = vmax.xlane.f32.xlu0 %v573
        %v575 = vpop.xlane.xlu0 %574
        %v576 = vsel %vm527, %v513, -inf
        %577 = vmax.xlane.f32.xlu0 %v576
        %v578 = vpop.xlane.xlu0 %577
        %v579 = vsel %vm527, %v515, -inf
        %580 = vmax.xlane.f32.xlu0 %v579
        %v581 = vpop.xlane.xlu0 %580
        %v582 = vsel %vm527, %v518, -inf
        %583 = vmax.xlane.f32.xlu0 %v582
        %v584 = vpop.xlane.xlu0 %583
        %v585 = vsel %vm527, %v520, -inf
        %586 = vmax.xlane.f32.xlu0 %v585
        %v587 = vpop.xlane.xlu0 %586
        %v588 = vsel %vm527, %v523, -inf
        %589 = vmax.xlane.f32.xlu0 %v588
        %v590 = vpop.xlane.xlu0 %589
        %v591 = vsel %vm527, %v525, -inf
        %592 = vmax.xlane.f32.xlu0 %v591
        %v593 = vpop.xlane.xlu0 %592
        %vm594 = vcmp.eq.f32.partialorder %v488, %v548
        %vm595 = vcmp.eq.f32.partialorder %v490, %v551
        %vm596 = vcmp.eq.f32.partialorder %v493, %v554
        %vm597 = vcmp.eq.f32.partialorder %v495, %v557
        %vm598 = vcmp.eq.f32.partialorder %v498, %v560
        %vm599 = vcmp.eq.f32.partialorder %v500, %v563
        %vm600 = vcmp.eq.f32.partialorder %v503, %v566
        %vm601 = vcmp.eq.f32.partialorder %v505, %v569
        %vm602 = vcmp.eq.f32.partialorder %v508, %v572
        %vm603 = vcmp.eq.f32.partialorder %v510, %v575
        %vm604 = vcmp.eq.f32.partialorder %v513, %v578
        %vm605 = vcmp.eq.f32.partialorder %v515, %v581
        %vm606 = vcmp.eq.f32.partialorder %v518, %v584
        %vm607 = vcmp.eq.f32.partialorder %v520, %v587
        %vm608 = vcmp.eq.f32.partialorder %v523, %v590
        %vm609 = vcmp.eq.f32.partialorder %v525, %v593
        %v610 = vsel %vm594, %v545, 8
        %v611 = vsel %vm595, %v545, 8
        %v612 = vsel %vm596, %v545, 8
        %v613 = vsel %vm597, %v545, 8
        %v614 = vsel %vm598, %v545, 8
        %v615 = vsel %vm599, %v545, 8
        %v616 = vsel %vm600, %v545, 8
        %v617 = vsel %vm601, %v545, 8
        %v618 = vsel %vm602, %v545, 8
        %v619 = vsel %vm603, %v545, 8
        %v620 = vsel %vm604, %v545, 8
        %v621 = vsel %vm605, %v545, 8
        %v622 = vsel %vm606, %v545, 8
        %v623 = vsel %vm607, %v545, 8
        %v624 = vsel %vm608, %v545, 8
        %v625 = vsel %vm609, %v545, 8
        %v626 = vsel %vm527, %v610, 2147483647
        %v627 = vand.u32 %v626, 65535
        %v628 = vshra.s32 %v626, 16
        %v629 = vcvt.s32.f32 %v627
        %v630 = vcvt.s32.f32 %v628
        %631 = vmin.xlane.f32.xlu0 %v630
        %v632 = vpop.xlane.xlu0 %631
        %vm633 = vcmp.eq.f32.partialorder %v630, %v632
        %v634 = vsel %vm633, %v629, inf
        %635 = vmin.xlane.f32.xlu0 %v634
        %v636 = vpop.xlane.xlu0 %635
        %v637 = vcvt.f32.s32 %v636
        %v638 = vcvt.f32.s32 %v632
        %v639 = vshll.u32 %v638, 16
        %v640 = vadd.s32 %v639, %v637
        %v641 = vsel %vm527, %v611, 2147483647
        %v642 = vand.u32 %v641, 65535
        %v643 = vshra.s32 %v641, 16
        %v644 = vcvt.s32.f32 %v642
        %v645 = vcvt.s32.f32 %v643
        %646 = vmin.xlane.f32.xlu0 %v645
        %v647 = vpop.xlane.xlu0 %646
        %vm648 = vcmp.eq.f32.partialorder %v645, %v647
        %v649 = vsel %vm648, %v644, inf
        %650 = vmin.xlane.f32.xlu0 %v649
        %v651 = vpop.xlane.xlu0 %650
        %v652 = vcvt.f32.s32 %v651
        %v653 = vcvt.f32.s32 %v647
        %v654 = vshll.u32 %v653, 16
        %v655 = vadd.s32 %v654, %v652
        %v656 = vsel %vm527, %v612, 2147483647
        %v657 = vand.u32 %v656, 65535
        %v658 = vshra.s32 %v656, 16
        %v659 = vcvt.s32.f32 %v657
        %v660 = vcvt.s32.f32 %v658
        %661 = vmin.xlane.f32.xlu0 %v660
        %v662 = vpop.xlane.xlu0 %661
        %vm663 = vcmp.eq.f32.partialorder %v660, %v662
        %v664 = vsel %vm663, %v659, inf
        %665 = vmin.xlane.f32.xlu0 %v664
        %v666 = vpop.xlane.xlu0 %665
        %v667 = vcvt.f32.s32 %v666
        %v668 = vcvt.f32.s32 %v662
        %v669 = vshll.u32 %v668, 16
        %v670 = vadd.s32 %v669, %v667
        %v671 = vsel %vm527, %v613, 2147483647
        %v672 = vand.u32 %v671, 65535
        %v673 = vshra.s32 %v671, 16
        %v674 = vcvt.s32.f32 %v672
        %v675 = vcvt.s32.f32 %v673
        %676 = vmin.xlane.f32.xlu0 %v675
        %v677 = vpop.xlane.xlu0 %676
        %vm678 = vcmp.eq.f32.partialorder %v675, %v677
        %v679 = vsel %vm678, %v674, inf
        %680 = vmin.xlane.f32.xlu0 %v679
        %v681 = vpop.xlane.xlu0 %680
        %v682 = vcvt.f32.s32 %v681
        %v683 = vcvt.f32.s32 %v677
        %v684 = vshll.u32 %v683, 16
        %v685 = vadd.s32 %v684, %v682
        %v686 = vsel %vm527, %v614, 2147483647
        %v687 = vand.u32 %v686, 65535
        %v688 = vshra.s32 %v686, 16
        %v689 = vcvt.s32.f32 %v687
        %v690 = vcvt.s32.f32 %v688
        %691 = vmin.xlane.f32.xlu0 %v690
        %v692 = vpop.xlane.xlu0 %691
        %vm693 = vcmp.eq.f32.partialorder %v690, %v692
        %v694 = vsel %vm693, %v689, inf
        %695 = vmin.xlane.f32.xlu0 %v694
        %v696 = vpop.xlane.xlu0 %695
        %v697 = vcvt.f32.s32 %v696
        %v698 = vcvt.f32.s32 %v692
        %v699 = vshll.u32 %v698, 16
        %v700 = vadd.s32 %v699, %v697
        %v701 = vsel %vm527, %v615, 2147483647
        %v702 = vand.u32 %v701, 65535
        %v703 = vshra.s32 %v701, 16
        %v704 = vcvt.s32.f32 %v702
        %v705 = vcvt.s32.f32 %v703
        %706 = vmin.xlane.f32.xlu0 %v705
        %v707 = vpop.xlane.xlu0 %706
        %vm708 = vcmp.eq.f32.partialorder %v705, %v707
        %v709 = vsel %vm708, %v704, inf
        %710 = vmin.xlane.f32.xlu0 %v709
        %v711 = vpop.xlane.xlu0 %710
        %v712 = vcvt.f32.s32 %v711
        %v713 = vcvt.f32.s32 %v707
        %v714 = vshll.u32 %v713, 16
        %v715 = vadd.s32 %v714, %v712
        %v716 = vsel %vm527, %v616, 2147483647
        %v717 = vand.u32 %v716, 65535
        %v718 = vshra.s32 %v716, 16
        %v719 = vcvt.s32.f32 %v717
        %v720 = vcvt.s32.f32 %v718
        %721 = vmin.xlane.f32.xlu0 %v720
        %v722 = vpop.xlane.xlu0 %721
        %vm723 = vcmp.eq.f32.partialorder %v720, %v722
        %v724 = vsel %vm723, %v719, inf
        %725 = vmin.xlane.f32.xlu0 %v724
        %v726 = vpop.xlane.xlu0 %725
        %v727 = vcvt.f32.s32 %v726
        %v728 = vcvt.f32.s32 %v722
        %v729 = vshll.u32 %v728, 16
        %v730 = vadd.s32 %v729, %v727
        %v731 = vsel %vm527, %v617, 2147483647
        %v732 = vand.u32 %v731, 65535
        %v733 = vshra.s32 %v731, 16
        %v734 = vcvt.s32.f32 %v732
        %v735 = vcvt.s32.f32 %v733
        %736 = vmin.xlane.f32.xlu0 %v735
        %v737 = vpop.xlane.xlu0 %736
        %vm738 = vcmp.eq.f32.partialorder %v735, %v737
        %v739 = vsel %vm738, %v734, inf
        %740 = vmin.xlane.f32.xlu0 %v739
        %v741 = vpop.xlane.xlu0 %740
        %v742 = vcvt.f32.s32 %v741
        %v743 = vcvt.f32.s32 %v737
        %v744 = vshll.u32 %v743, 16
        %v745 = vadd.s32 %v744, %v742
        %v746 = vsel %vm527, %v618, 2147483647
        %v747 = vand.u32 %v746, 65535
        %v748 = vshra.s32 %v746, 16
        %v749 = vcvt.s32.f32 %v747
        %v750 = vcvt.s32.f32 %v748
        %751 = vmin.xlane.f32.xlu0 %v750
        %v752 = vpop.xlane.xlu0 %751
        %vm753 = vcmp.eq.f32.partialorder %v750, %v752
        %v754 = vsel %vm753, %v749, inf
        %755 = vmin.xlane.f32.xlu0 %v754
        %v756 = vpop.xlane.xlu0 %755
        %v757 = vcvt.f32.s32 %v756
        %v758 = vcvt.f32.s32 %v752
        %v759 = vshll.u32 %v758, 16
        %v760 = vadd.s32 %v759, %v757
        %v761 = vsel %vm527, %v619, 2147483647
        %v762 = vand.u32 %v761, 65535
        %v763 = vshra.s32 %v761, 16
        %v764 = vcvt.s32.f32 %v762
        %v765 = vcvt.s32.f32 %v763
        %766 = vmin.xlane.f32.xlu0 %v765
        %v767 = vpop.xlane.xlu0 %766
        %vm768 = vcmp.eq.f32.partialorder %v765, %v767
        %v769 = vsel %vm768, %v764, inf
        %770 = vmin.xlane.f32.xlu0 %v769
        %v771 = vpop.xlane.xlu0 %770
        %v772 = vcvt.f32.s32 %v771
        %v773 = vcvt.f32.s32 %v767
        %v774 = vshll.u32 %v773, 16
        %v775 = vadd.s32 %v774, %v772
        %v776 = vsel %vm527, %v620, 2147483647
        %v777 = vand.u32 %v776, 65535
        %v778 = vshra.s32 %v776, 16
        %v779 = vcvt.s32.f32 %v777
        %v780 = vcvt.s32.f32 %v778
        %781 = vmin.xlane.f32.xlu0 %v780
        %v782 = vpop.xlane.xlu0 %781
        %vm783 = vcmp.eq.f32.partialorder %v780, %v782
        %v784 = vsel %vm783, %v779, inf
        %785 = vmin.xlane.f32.xlu0 %v784
        %v786 = vpop.xlane.xlu0 %785
        %v787 = vcvt.f32.s32 %v786
        %v788 = vcvt.f32.s32 %v782
        %v789 = vshll.u32 %v788, 16
        %v790 = vadd.s32 %v789, %v787
        %v791 = vsel %vm527, %v621, 2147483647
        %v792 = vand.u32 %v791, 65535
        %v793 = vshra.s32 %v791, 16
        %v794 = vcvt.s32.f32 %v792
        %v795 = vcvt.s32.f32 %v793
        %796 = vmin.xlane.f32.xlu0 %v795
        %v797 = vpop.xlane.xlu0 %796
        %vm798 = vcmp.eq.f32.partialorder %v795, %v797
        %v799 = vsel %vm798, %v794, inf
        %800 = vmin.xlane.f32.xlu0 %v799
        %v801 = vpop.xlane.xlu0 %800
        %v802 = vcvt.f32.s32 %v801
        %v803 = vcvt.f32.s32 %v797
        %v804 = vshll.u32 %v803, 16
        %v805 = vadd.s32 %v804, %v802
        %v806 = vsel %vm527, %v622, 2147483647
        %v807 = vand.u32 %v806, 65535
        %v808 = vshra.s32 %v806, 16
        %v809 = vcvt.s32.f32 %v807
        %v810 = vcvt.s32.f32 %v808
        %811 = vmin.xlane.f32.xlu0 %v810
        %v812 = vpop.xlane.xlu0 %811
        %vm813 = vcmp.eq.f32.partialorder %v810, %v812
        %v814 = vsel %vm813, %v809, inf
        %815 = vmin.xlane.f32.xlu0 %v814
        %v816 = vpop.xlane.xlu0 %815
        %v817 = vcvt.f32.s32 %v816
        %v818 = vcvt.f32.s32 %v812
        %v819 = vshll.u32 %v818, 16
        %v820 = vadd.s32 %v819, %v817
        %v821 = vsel %vm527, %v623, 2147483647
        %v822 = vand.u32 %v821, 65535
        %v823 = vshra.s32 %v821, 16
        %v824 = vcvt.s32.f32 %v822
        %v825 = vcvt.s32.f32 %v823
        %826 = vmin.xlane.f32.xlu0 %v825
        %v827 = vpop.xlane.xlu0 %826
        %vm828 = vcmp.eq.f32.partialorder %v825, %v827
        %v829 = vsel %vm828, %v824, inf
        %830 = vmin.xlane.f32.xlu0 %v829
        %v831 = vpop.xlane.xlu0 %830
        %v832 = vcvt.f32.s32 %v831
        %v833 = vcvt.f32.s32 %v827
        %v834 = vshll.u32 %v833, 16
        %v835 = vadd.s32 %v834, %v832
        %v836 = vsel %vm527, %v624, 2147483647
        %v837 = vand.u32 %v836, 65535
        %v838 = vshra.s32 %v836, 16
        %v839 = vcvt.s32.f32 %v837
        %v840 = vcvt.s32.f32 %v838
        %841 = vmin.xlane.f32.xlu0 %v840
        %v842 = vpop.xlane.xlu0 %841
        %vm843 = vcmp.eq.f32.partialorder %v840, %v842
        %v844 = vsel %vm843, %v839, inf
        %845 = vmin.xlane.f32.xlu0 %v844
        %v846 = vpop.xlane.xlu0 %845
        %v847 = vcvt.f32.s32 %v846
        %v848 = vcvt.f32.s32 %v842
        %v849 = vshll.u32 %v848, 16
        %v850 = vadd.s32 %v849, %v847
        %v851 = vsel %vm527, %v625, 2147483647
        %v852 = vand.u32 %v851, 65535
        %v853 = vshra.s32 %v851, 16
        %v854 = vcvt.s32.f32 %v852
        %v855 = vcvt.s32.f32 %v853
        %856 = vmin.xlane.f32.xlu0 %v855
        %v857 = vpop.xlane.xlu0 %856
        %vm858 = vcmp.eq.f32.partialorder %v855, %v857
        %v859 = vsel %vm858, %v854, inf
        %860 = vmin.xlane.f32.xlu0 %v859
        %v861 = vpop.xlane.xlu0 %860
        %v862 = vcvt.f32.s32 %v861
        %v863 = vcvt.f32.s32 %v857
        %v864 = vshll.u32 %v863, 16
        %v865 = vadd.s32 %v864, %v862
        %vm866 = vcmask 7168
        %867 = vst.msk [vmem:[%s253] sm:$0xff] %vm866, %v640
        %868 = vst.msk [vmem:[%s253 + $0x8] sm:$0xff] %vm866, %v655
        %869 = vst.msk [vmem:[%s253 + $0x10] sm:$0xff] %vm866, %v670
        %870 = vst.msk [vmem:[%s253 + $0x18] sm:$0xff] %vm866, %v685
        %871 = vst.msk [vmem:[%s253 + $0x20] sm:$0xff] %vm866, %v700
        %872 = vst.msk [vmem:[%s253 + $0x28] sm:$0xff] %vm866, %v715
        %873 = vst.msk [vmem:[%s253 + $0x30] sm:$0xff] %vm866, %v730
        %874 = vst.msk [vmem:[%s253 + $0x38] sm:$0xff] %vm866, %v745
        %875 = vst.msk [vmem:[%s253 + $0x40] sm:$0xff] %vm866, %v760
        %876 = vst.msk [vmem:[%s253 + $0x48] sm:$0xff] %vm866, %v775
        %877 = vst.msk [vmem:[%s253 + $0x50] sm:$0xff] %vm866, %v790
        %878 = vst.msk [vmem:[%s253 + $0x58] sm:$0xff] %vm866, %v805
        %879 = vst.msk [vmem:[%s253 + $0x60] sm:$0xff] %vm866, %v820
        %880 = vst.msk [vmem:[%s253 + $0x68] sm:$0xff] %vm866, %v835
        %881 = vst.msk [vmem:[%s253 + $0x70] sm:$0xff] %vm866, %v850
        %882 = vst.msk [vmem:[%s253 + $0x78] sm:$0xff] %vm866, %v865
        %s883 = smul.u32 16, %s21
        %p884 = scmp.lt.s32.totalorder %s883, 31
        %s885 = scalar_select %p884, %s883, 31
        %s886 = smul.addr %s885, 8
        %s887 = scalar_lea.vmem %s5, %s886
        %s888 = sand.u32 %s165, 1
        %s889 = scalar_lea.sflag [#allocation3], %s888
        %s890 = sand.u32 %s165, 1
        %s891 = smul.addr %s890, 128
        %s892 = scalar_lea.vmem [#allocation2], %s891
        // Predicated region
        $region41: #{mlp_forward.1} parent=39 // pred_check
          %p893 = pneg %p149
        $region42: #{mlp_forward.1} parent=39 // pred_check_branch
          %895 = sbr.rel (%p893) target = $region44
        $region43: #{mlp_forward.1} parent=39 // pred_region
          %s896 = smul.u32 16, %s21
        $region44: #{mlp_forward.1} parent=39 // pred_fallthru
          _
        // Predicated region
        $region45: #{mlp_forward.1} parent=39 // pred_check
          %p897 = pneg %p175
        $region46: #{mlp_forward.1} parent=39 // pred_check_branch
          %899 = sbr.rel (%p897) target = $region48
        $region47: #{mlp_forward.1} parent=39 // pred_region
          %s900 = smul.u32 16, %s21
          %902 = vsyncadd %s889, 0
          %s903 = smul.addr %s900, 8
          %s904 = scalar_lea.hbm %s6, %s903
          %s905 = sshll.u32 %s892, 4
          %s906 = int_to_ptr.vmem [resolvable:$true] %s905
          %s907 = sshll.u32 %s904, 4
          %s908 = int_to_ptr.hbm [resolvable:$true] %s907
          %913 = dma.vmem_to_hbm [thread:$0]  %s906, 2048, %s908, %s889, 128, 128, 8
        $region48: #{mlp_forward.1} parent=39 // pred_fallthru
          _
      $region40: #{mlp_forward.1} parent=5 // pred_fallthru
        _
      %p914 = scmp.le.s32.totalorder 2, %s16
      // Predicated region
      $region49: #{mlp_forward.1} parent=5 // pred_check
        %p915 = pneg %p914
      $region50: #{mlp_forward.1} parent=5 // pred_check_branch
        %917 = sbr.rel (%p915) target = $region52
      $region51: #{mlp_forward.1} parent=5 // pred_region
        %s918 = ssub.s32 %s16, 2
        // Predicated region
        $region53: #{mlp_forward.1} parent=51 // pred_check
          %p919 = pneg %p155
        $region54: #{mlp_forward.1} parent=51 // pred_check_branch
          %921 = sbr.rel (%p919) target = $region56
        $region55: #{mlp_forward.1} parent=51 // pred_region
          %s922 = smul.u32 16, %s22
          %p923 = scmp.lt.s32.totalorder %s922, 31
          %s924 = scalar_select %p923, %s922, 31
          %s925 = smul.addr %s924, 8
          %s926 = scalar_lea.vmem %s5, %s925
        $region56: #{mlp_forward.1} parent=51 // pred_fallthru
          _
        // Predicated region
        $region57: #{mlp_forward.1} parent=51 // pred_check
          %p927 = pneg %p181
        $region58: #{mlp_forward.1} parent=51 // pred_check_branch
          %929 = sbr.rel (%p927) target = $region60
        $region59: #{mlp_forward.1} parent=51 // pred_region
          %s930 = sand.u32 %s166, 1
          %s931 = scalar_lea.sflag [#allocation3], %s930
          %s932 = sand.u32 %s166, 1
          %s933 = smul.addr %s932, 128
          %s934 = scalar_lea.vmem [#allocation2], %s933
          %936 = dma.done %s931, 2048
        $region60: #{mlp_forward.1} parent=51 // pred_fallthru
          _
      $region52: #{mlp_forward.1} parent=5 // pred_fallthru
        _
    $region6: #{mlp_forward.1} parent=1 // loop_footer
      %s20 = sadd.s32 1, %s16
    $region7: #{mlp_forward.1} parent=1 // loop_footer_branch
      %15 = sbr.rel target = $region3
    $region8: #{mlp_forward.1} parent=1 // loop_exit
      _
    %937 = vsyncpa [#allocation3], 1
    %s938 = scalar_lea.sflag [#allocation3], 1
    %939 = vsyncpa %s938, 1

</llo_original>
